<compile_context>
chip_gen: v7x
topology: tpu7x:2x2x1
jax: 0.10.0
libtpu: 0.0.40
codegen_flags: <defaults>
</compile_context>

<pallas_src>
import jax
import jax.numpy as jnp
from jax.experimental import pallas as pl
from jax.experimental.pallas import tpu as pltpu


def _embed_gather_kernel(ts_ref, table_hbm, out_ref, sem):
    """Row-gather via manual DMA.

    ts_ref:    SMEM (B,)              int32    -- scalar-prefetched timesteps
    table_hbm: HBM  (max_steps, dim)  float32  -- embedding weights (pl.ANY)
    out_ref:   VMEM (B, dim)          float32  -- gathered embeddings
    sem:       DMA semaphore array, shape (B,)
    """
    B = out_ref.shape[0]
    max_steps = table_hbm.shape[0]

    # Issue every row DMA before waiting on any of them so the (tiny, ~512 B)
    # transfers overlap instead of serializing their latencies.
    copies = []
    for i in range(B):  # B is static and small; fully unrolled at trace time
        t = ts_ref[i]
        # nn.Embedding errors on out-of-range indices; Pallas HBM/VMEM reads
        # have no runtime bounds check, so clamp defensively instead of
        # silently reading garbage.
        t = jnp.minimum(jnp.maximum(t, 0), max_steps - 1)
        cp = pltpu.make_async_copy(
            table_hbm.at[pl.ds(t, 1), :],   # (1, dim) row in HBM (dynamic row)
            out_ref.at[pl.ds(i, 1), :],     # (1, dim) row of the VMEM output
            sem.at[i],
        )
        cp.start()
        copies.append(cp)

    for cp in copies:
        cp.wait()


def learned_time_embedding(timesteps: jax.Array, table: jax.Array) -> jax.Array:
    """Pallas equivalent of LearnedTimeEmbedding.forward (embedding lookup)."""
    B = timesteps.shape[0]
    _, dim = table.shape

    grid_spec = pltpu.PrefetchScalarGridSpec(
        num_scalar_prefetch=1,                       # timesteps -> SMEM
        grid=(1,),                                   # single step: ~0.35us fixed cost, once
        in_specs=[
            pl.BlockSpec(memory_space=pl.ANY),       # table stays in HBM, no auto-DMA
        ],
        out_specs=pl.BlockSpec((B, dim), lambda i, ts: (0, 0)),
        scratch_shapes=[pltpu.SemaphoreType.DMA((B,))],
    )

    return pl.pallas_call(
        _embed_gather_kernel,
        out_shape=jax.ShapeDtypeStruct((B, dim), table.dtype),
        grid_spec=grid_spec,
        compiler_params=pltpu.CompilerParams(
            dimension_semantics=("arbitrary",),
        ),
    )(timesteps.astype(jnp.int32), table)


if __name__ == "__main__":
    # Module hyperparameters (consistent with LearnedTimeEmbedding.__init__).
    dim = 128
    max_steps = 1000
    batch = 8

    key = jax.random.PRNGKey(0)
    k_table, k_ts = jax.random.split(key)

    # nn.Embedding default init: weights ~ N(0, 1).
    table = jax.random.normal(k_table, (max_steps, dim), dtype=jnp.float32)
    timesteps = jax.random.randint(k_ts, (batch,), 0, max_steps, dtype=jnp.int32)

    out = learned_time_embedding(timesteps, table)
    out = jax.block_until_ready(out)

    # Reference: plain JAX gather (same semantics as the torch embedding lookup).
    ref = jnp.take(table, timesteps, axis=0)
    assert out.shape == (batch, dim)
    assert out.dtype == table.dtype
    assert jnp.allclose(out, ref), "Pallas embedding gather mismatch vs reference"

    print("KERNEL_OK")
</pallas_src>

<mosaic_0001>
module attributes {stable_mosaic.version = 11 : i64} {
  func.func @_embed_gather_kernel(%arg0: i32, %arg1: memref<8xi32, #tpu.memory_space<smem>>, %arg2: memref<1000x128xf32, #tpu.memory_space<any>>, %arg3: memref<8x128xf32, #tpu.memory_space<vmem>>, %arg4: memref<8x!tpu.dma_semaphore, #tpu.memory_space<semaphore_mem>>) attributes {dimension_semantics = [#tpu.dimension_semantics<arbitrary>], iteration_bounds = array<i64: 1>, scalar_prefetch = 1 : i64, scratch_operands = 1 : i64, tpu.core_type = #tpu.core_type<tc>, window_params = [{}, {pipeline_mode = #tpu.pipeline_mode<synchronous>, transform_indices = @transform_1, window_bounds = array<i64: 8, 128>}]} {
    %c0 = arith.constant 0 : index
    %0 = memref.load %arg1[%c0] : memref<8xi32, #tpu.memory_space<smem>>
    %c0_i32 = arith.constant 0 : i32
    %1 = arith.maxsi %0, %c0_i32 : i32
    %c999_i32 = arith.constant 999 : i32
    %2 = arith.minsi %1, %c999_i32 : i32
    %c0_i32_0 = arith.constant 0 : i32
    %c0_i32_1 = arith.constant 0 : i32
    %3 = tpu.memref_slice %arg2[%2, %c0_i32_1] : memref<1000x128xf32, #tpu.memory_space<any>> -> memref<1x128xf32, #tpu.memory_space<any>>
    %c0_i32_2 = arith.constant 0 : i32
    %c0_i32_3 = arith.constant 0 : i32
    %4 = tpu.memref_slice %arg3[%c0_i32_2, %c0_i32_3] : memref<8x128xf32, #tpu.memory_space<vmem>> -> memref<1x128xf32, #tpu.memory_space<vmem>>
    %5 = tpu.memref_slice %arg4[%c0_i32_0] : memref<8x!tpu.dma_semaphore, #tpu.memory_space<semaphore_mem>> -> memref<1x!tpu.dma_semaphore, #tpu.memory_space<semaphore_mem>>
    %6 = tpu.memref_squeeze %5 : memref<1x!tpu.dma_semaphore, #tpu.memory_space<semaphore_mem>> -> memref<!tpu.dma_semaphore, #tpu.memory_space<semaphore_mem>>
    tpu.enqueue_dma source(%3 : memref<1x128xf32, #tpu.memory_space<any>>) target(%4 : memref<1x128xf32, #tpu.memory_space<vmem>>) target_semaphore(%6 : memref<!tpu.dma_semaphore, #tpu.memory_space<semaphore_mem>>)
    %c1 = arith.constant 1 : index
    %7 = memref.load %arg1[%c1] : memref<8xi32, #tpu.memory_space<smem>>
    %c0_i32_4 = arith.constant 0 : i32
    %8 = arith.maxsi %7, %c0_i32_4 : i32
    %c999_i32_5 = arith.constant 999 : i32
    %9 = arith.minsi %8, %c999_i32_5 : i32
    %c1_i32 = arith.constant 1 : i32
    %c0_i32_6 = arith.constant 0 : i32
    %10 = tpu.memref_slice %arg2[%9, %c0_i32_6] : memref<1000x128xf32, #tpu.memory_space<any>> -> memref<1x128xf32, #tpu.memory_space<any>>
    %c1_i32_7 = arith.constant 1 : i32
    %c0_i32_8 = arith.constant 0 : i32
    %11 = tpu.memref_slice %arg3[%c1_i32_7, %c0_i32_8] : memref<8x128xf32, #tpu.memory_space<vmem>> -> memref<1x128xf32, #tpu.memory_space<vmem>>
    %12 = tpu.memref_slice %arg4[%c1_i32] : memref<8x!tpu.dma_semaphore, #tpu.memory_space<semaphore_mem>> -> memref<1x!tpu.dma_semaphore, #tpu.memory_space<semaphore_mem>>
    %13 = tpu.memref_squeeze %12 : memref<1x!tpu.dma_semaphore, #tpu.memory_space<semaphore_mem>> -> memref<!tpu.dma_semaphore, #tpu.memory_space<semaphore_mem>>
    tpu.enqueue_dma source(%10 : memref<1x128xf32, #tpu.memory_space<any>>) target(%11 : memref<1x128xf32, #tpu.memory_space<vmem>>) target_semaphore(%13 : memref<!tpu.dma_semaphore, #tpu.memory_space<semaphore_mem>>)
    %c2 = arith.constant 2 : index
    %14 = memref.load %arg1[%c2] : memref<8xi32, #tpu.memory_space<smem>>
    %c0_i32_9 = arith.constant 0 : i32
    %15 = arith.maxsi %14, %c0_i32_9 : i32
    %c999_i32_10 = arith.constant 999 : i32
    %16 = arith.minsi %15, %c999_i32_10 : i32
    %c2_i32 = arith.constant 2 : i32
    %c0_i32_11 = arith.constant 0 : i32
    %17 = tpu.memref_slice %arg2[%16, %c0_i32_11] : memref<1000x128xf32, #tpu.memory_space<any>> -> memref<1x128xf32, #tpu.memory_space<any>>
    %c2_i32_12 = arith.constant 2 : i32
    %c0_i32_13 = arith.constant 0 : i32
    %18 = tpu.memref_slice %arg3[%c2_i32_12, %c0_i32_13] : memref<8x128xf32, #tpu.memory_space<vmem>> -> memref<1x128xf32, #tpu.memory_space<vmem>>
    %19 = tpu.memref_slice %arg4[%c2_i32] : memref<8x!tpu.dma_semaphore, #tpu.memory_space<semaphore_mem>> -> memref<1x!tpu.dma_semaphore, #tpu.memory_space<semaphore_mem>>
    %20 = tpu.memref_squeeze %19 : memref<1x!tpu.dma_semaphore, #tpu.memory_space<semaphore_mem>> -> memref<!tpu.dma_semaphore, #tpu.memory_space<semaphore_mem>>
    tpu.enqueue_dma source(%17 : memref<1x128xf32, #tpu.memory_space<any>>) target(%18 : memref<1x128xf32, #tpu.memory_space<vmem>>) target_semaphore(%20 : memref<!tpu.dma_semaphore, #tpu.memory_space<semaphore_mem>>)
    %c3 = arith.constant 3 : index
    %21 = memref.load %arg1[%c3] : memref<8xi32, #tpu.memory_space<smem>>
    %c0_i32_14 = arith.constant 0 : i32
    %22 = arith.maxsi %21, %c0_i32_14 : i32
    %c999_i32_15 = arith.constant 999 : i32
    %23 = arith.minsi %22, %c999_i32_15 : i32
    %c3_i32 = arith.constant 3 : i32
    %c0_i32_16 = arith.constant 0 : i32
    %24 = tpu.memref_slice %arg2[%23, %c0_i32_16] : memref<1000x128xf32, #tpu.memory_space<any>> -> memref<1x128xf32, #tpu.memory_space<any>>
    %c3_i32_17 = arith.constant 3 : i32
    %c0_i32_18 = arith.constant 0 : i32
    %25 = tpu.memref_slice %arg3[%c3_i32_17, %c0_i32_18] : memref<8x128xf32, #tpu.memory_space<vmem>> -> memref<1x128xf32, #tpu.memory_space<vmem>>
    %26 = tpu.memref_slice %arg4[%c3_i32] : memref<8x!tpu.dma_semaphore, #tpu.memory_space<semaphore_mem>> -> memref<1x!tpu.dma_semaphore, #tpu.memory_space<semaphore_mem>>
    %27 = tpu.memref_squeeze %26 : memref<1x!tpu.dma_semaphore, #tpu.memory_space<semaphore_mem>> -> memref<!tpu.dma_semaphore, #tpu.memory_space<semaphore_mem>>
    tpu.enqueue_dma source(%24 : memref<1x128xf32, #tpu.memory_space<any>>) target(%25 : memref<1x128xf32, #tpu.memory_space<vmem>>) target_semaphore(%27 : memref<!tpu.dma_semaphore, #tpu.memory_space<semaphore_mem>>)
    %c4 = arith.constant 4 : index
    %28 = memref.load %arg1[%c4] : memref<8xi32, #tpu.memory_space<smem>>
    %c0_i32_19 = arith.constant 0 : i32
    %29 = arith.maxsi %28, %c0_i32_19 : i32
    %c999_i32_20 = arith.constant 999 : i32
    %30 = arith.minsi %29, %c999_i32_20 : i32
    %c4_i32 = arith.constant 4 : i32
    %c0_i32_21 = arith.constant 0 : i32
    %31 = tpu.memref_slice %arg2[%30, %c0_i32_21] : memref<1000x128xf32, #tpu.memory_space<any>> -> memref<1x128xf32, #tpu.memory_space<any>>
    %c4_i32_22 = arith.constant 4 : i32
    %c0_i32_23 = arith.constant 0 : i32
    %32 = tpu.memref_slice %arg3[%c4_i32_22, %c0_i32_23] : memref<8x128xf32, #tpu.memory_space<vmem>> -> memref<1x128xf32, #tpu.memory_space<vmem>>
    %33 = tpu.memref_slice %arg4[%c4_i32] : memref<8x!tpu.dma_semaphore, #tpu.memory_space<semaphore_mem>> -> memref<1x!tpu.dma_semaphore, #tpu.memory_space<semaphore_mem>>
    %34 = tpu.memref_squeeze %33 : memref<1x!tpu.dma_semaphore, #tpu.memory_space<semaphore_mem>> -> memref<!tpu.dma_semaphore, #tpu.memory_space<semaphore_mem>>
    tpu.enqueue_dma source(%31 : memref<1x128xf32, #tpu.memory_space<any>>) target(%32 : memref<1x128xf32, #tpu.memory_space<vmem>>) target_semaphore(%34 : memref<!tpu.dma_semaphore, #tpu.memory_space<semaphore_mem>>)
    %c5 = arith.constant 5 : index
    %35 = memref.load %arg1[%c5] : memref<8xi32, #tpu.memory_space<smem>>
    %c0_i32_24 = arith.constant 0 : i32
    %36 = arith.maxsi %35, %c0_i32_24 : i32
    %c999_i32_25 = arith.constant 999 : i32
    %37 = arith.minsi %36, %c999_i32_25 : i32
    %c5_i32 = arith.constant 5 : i32
    %c0_i32_26 = arith.constant 0 : i32
    %38 = tpu.memref_slice %arg2[%37, %c0_i32_26] : memref<1000x128xf32, #tpu.memory_space<any>> -> memref<1x128xf32, #tpu.memory_space<any>>
    %c5_i32_27 = arith.constant 5 : i32
    %c0_i32_28 = arith.constant 0 : i32
    %39 = tpu.memref_slice %arg3[%c5_i32_27, %c0_i32_28] : memref<8x128xf32, #tpu.memory_space<vmem>> -> memref<1x128xf32, #tpu.memory_space<vmem>>
    %40 = tpu.memref_slice %arg4[%c5_i32] : memref<8x!tpu.dma_semaphore, #tpu.memory_space<semaphore_mem>> -> memref<1x!tpu.dma_semaphore, #tpu.memory_space<semaphore_mem>>
    %41 = tpu.memref_squeeze %40 : memref<1x!tpu.dma_semaphore, #tpu.memory_space<semaphore_mem>> -> memref<!tpu.dma_semaphore, #tpu.memory_space<semaphore_mem>>
    tpu.enqueue_dma source(%38 : memref<1x128xf32, #tpu.memory_space<any>>) target(%39 : memref<1x128xf32, #tpu.memory_space<vmem>>) target_semaphore(%41 : memref<!tpu.dma_semaphore, #tpu.memory_space<semaphore_mem>>)
    %c6 = arith.constant 6 : index
    %42 = memref.load %arg1[%c6] : memref<8xi32, #tpu.memory_space<smem>>
    %c0_i32_29 = arith.constant 0 : i32
    %43 = arith.maxsi %42, %c0_i32_29 : i32
    %c999_i32_30 = arith.constant 999 : i32
    %44 = arith.minsi %43, %c999_i32_30 : i32
    %c6_i32 = arith.constant 6 : i32
    %c0_i32_31 = arith.constant 0 : i32
    %45 = tpu.memref_slice %arg2[%44, %c0_i32_31] : memref<1000x128xf32, #tpu.memory_space<any>> -> memref<1x128xf32, #tpu.memory_space<any>>
    %c6_i32_32 = arith.constant 6 : i32
    %c0_i32_33 = arith.constant 0 : i32
    %46 = tpu.memref_slice %arg3[%c6_i32_32, %c0_i32_33] : memref<8x128xf32, #tpu.memory_space<vmem>> -> memref<1x128xf32, #tpu.memory_space<vmem>>
    %47 = tpu.memref_slice %arg4[%c6_i32] : memref<8x!tpu.dma_semaphore, #tpu.memory_space<semaphore_mem>> -> memref<1x!tpu.dma_semaphore, #tpu.memory_space<semaphore_mem>>
    %48 = tpu.memref_squeeze %47 : memref<1x!tpu.dma_semaphore, #tpu.memory_space<semaphore_mem>> -> memref<!tpu.dma_semaphore, #tpu.memory_space<semaphore_mem>>
    tpu.enqueue_dma source(%45 : memref<1x128xf32, #tpu.memory_space<any>>) target(%46 : memref<1x128xf32, #tpu.memory_space<vmem>>) target_semaphore(%48 : memref<!tpu.dma_semaphore, #tpu.memory_space<semaphore_mem>>)
    %c7 = arith.constant 7 : index
    %49 = memref.load %arg1[%c7] : memref<8xi32, #tpu.memory_space<smem>>
    %c0_i32_34 = arith.constant 0 : i32
    %50 = arith.maxsi %49, %c0_i32_34 : i32
    %c999_i32_35 = arith.constant 999 : i32
    %51 = arith.minsi %50, %c999_i32_35 : i32
    %c7_i32 = arith.constant 7 : i32
    %c0_i32_36 = arith.constant 0 : i32
    %52 = tpu.memref_slice %arg2[%51, %c0_i32_36] : memref<1000x128xf32, #tpu.memory_space<any>> -> memref<1x128xf32, #tpu.memory_space<any>>
    %c7_i32_37 = arith.constant 7 : i32
    %c0_i32_38 = arith.constant 0 : i32
    %53 = tpu.memref_slice %arg3[%c7_i32_37, %c0_i32_38] : memref<8x128xf32, #tpu.memory_space<vmem>> -> memref<1x128xf32, #tpu.memory_space<vmem>>
    %54 = tpu.memref_slice %arg4[%c7_i32] : memref<8x!tpu.dma_semaphore, #tpu.memory_space<semaphore_mem>> -> memref<1x!tpu.dma_semaphore, #tpu.memory_space<semaphore_mem>>
    %55 = tpu.memref_squeeze %54 : memref<1x!tpu.dma_semaphore, #tpu.memory_space<semaphore_mem>> -> memref<!tpu.dma_semaphore, #tpu.memory_space<semaphore_mem>>
    tpu.enqueue_dma source(%52 : memref<1x128xf32, #tpu.memory_space<any>>) target(%53 : memref<1x128xf32, #tpu.memory_space<vmem>>) target_semaphore(%55 : memref<!tpu.dma_semaphore, #tpu.memory_space<semaphore_mem>>)
    %c0_i32_39 = arith.constant 0 : i32
    %c0_i32_40 = arith.constant 0 : i32
    %56 = tpu.memref_slice %arg2[%2, %c0_i32_40] : memref<1000x128xf32, #tpu.memory_space<any>> -> memref<1x128xf32, #tpu.memory_space<any>>
    %c0_i32_41 = arith.constant 0 : i32
    %c0_i32_42 = arith.constant 0 : i32
    %57 = tpu.memref_slice %arg3[%c0_i32_41, %c0_i32_42] : memref<8x128xf32, #tpu.memory_space<vmem>> -> memref<1x128xf32, #tpu.memory_space<vmem>>
    %58 = tpu.memref_slice %arg4[%c0_i32_39] : memref<8x!tpu.dma_semaphore, #tpu.memory_space<semaphore_mem>> -> memref<1x!tpu.dma_semaphore, #tpu.memory_space<semaphore_mem>>
    %59 = tpu.memref_squeeze %58 : memref<1x!tpu.dma_semaphore, #tpu.memory_space<semaphore_mem>> -> memref<!tpu.dma_semaphore, #tpu.memory_space<semaphore_mem>>
    tpu.wait_dma2 semaphore(%59 : memref<!tpu.dma_semaphore, #tpu.memory_space<semaphore_mem>>) src(%56 : memref<1x128xf32, #tpu.memory_space<any>>) dst(%57 : memref<1x128xf32, #tpu.memory_space<vmem>>)
    %c1_i32_43 = arith.constant 1 : i32
    %c0_i32_44 = arith.constant 0 : i32
    %60 = tpu.memref_slice %arg2[%9, %c0_i32_44] : memref<1000x128xf32, #tpu.memory_space<any>> -> memref<1x128xf32, #tpu.memory_space<any>>
    %c1_i32_45 = arith.constant 1 : i32
    %c0_i32_46 = arith.constant 0 : i32
    %61 = tpu.memref_slice %arg3[%c1_i32_45, %c0_i32_46] : memref<8x128xf32, #tpu.memory_space<vmem>> -> memref<1x128xf32, #tpu.memory_space<vmem>>
    %62 = tpu.memref_slice %arg4[%c1_i32_43] : memref<8x!tpu.dma_semaphore, #tpu.memory_space<semaphore_mem>> -> memref<1x!tpu.dma_semaphore, #tpu.memory_space<semaphore_mem>>
    %63 = tpu.memref_squeeze %62 : memref<1x!tpu.dma_semaphore, #tpu.memory_space<semaphore_mem>> -> memref<!tpu.dma_semaphore, #tpu.memory_space<semaphore_mem>>
    tpu.wait_dma2 semaphore(%63 : memref<!tpu.dma_semaphore, #tpu.memory_space<semaphore_mem>>) src(%60 : memref<1x128xf32, #tpu.memory_space<any>>) dst(%61 : memref<1x128xf32, #tpu.memory_space<vmem>>)
    %c2_i32_47 = arith.constant 2 : i32
    %c0_i32_48 = arith.constant 0 : i32
    %64 = tpu.memref_slice %arg2[%16, %c0_i32_48] : memref<1000x128xf32, #tpu.memory_space<any>> -> memref<1x128xf32, #tpu.memory_space<any>>
    %c2_i32_49 = arith.constant 2 : i32
    %c0_i32_50 = arith.constant 0 : i32
    %65 = tpu.memref_slice %arg3[%c2_i32_49, %c0_i32_50] : memref<8x128xf32, #tpu.memory_space<vmem>> -> memref<1x128xf32, #tpu.memory_space<vmem>>
    %66 = tpu.memref_slice %arg4[%c2_i32_47] : memref<8x!tpu.dma_semaphore, #tpu.memory_space<semaphore_mem>> -> memref<1x!tpu.dma_semaphore, #tpu.memory_space<semaphore_mem>>
    %67 = tpu.memref_squeeze %66 : memref<1x!tpu.dma_semaphore, #tpu.memory_space<semaphore_mem>> -> memref<!tpu.dma_semaphore, #tpu.memory_space<semaphore_mem>>
    tpu.wait_dma2 semaphore(%67 : memref<!tpu.dma_semaphore, #tpu.memory_space<semaphore_mem>>) src(%64 : memref<1x128xf32, #tpu.memory_space<any>>) dst(%65 : memref<1x128xf32, #tpu.memory_space<vmem>>)
    %c3_i32_51 = arith.constant 3 : i32
    %c0_i32_52 = arith.constant 0 : i32
    %68 = tpu.memref_slice %arg2[%23, %c0_i32_52] : memref<1000x128xf32, #tpu.memory_space<any>> -> memref<1x128xf32, #tpu.memory_space<any>>
    %c3_i32_53 = arith.constant 3 : i32
    %c0_i32_54 = arith.constant 0 : i32
    %69 = tpu.memref_slice %arg3[%c3_i32_53, %c0_i32_54] : memref<8x128xf32, #tpu.memory_space<vmem>> -> memref<1x128xf32, #tpu.memory_space<vmem>>
    %70 = tpu.memref_slice %arg4[%c3_i32_51] : memref<8x!tpu.dma_semaphore, #tpu.memory_space<semaphore_mem>> -> memref<1x!tpu.dma_semaphore, #tpu.memory_space<semaphore_mem>>
    %71 = tpu.memref_squeeze %70 : memref<1x!tpu.dma_semaphore, #tpu.memory_space<semaphore_mem>> -> memref<!tpu.dma_semaphore, #tpu.memory_space<semaphore_mem>>
    tpu.wait_dma2 semaphore(%71 : memref<!tpu.dma_semaphore, #tpu.memory_space<semaphore_mem>>) src(%68 : memref<1x128xf32, #tpu.memory_space<any>>) dst(%69 : memref<1x128xf32, #tpu.memory_space<vmem>>)
    %c4_i32_55 = arith.constant 4 : i32
    %c0_i32_56 = arith.constant 0 : i32
    %72 = tpu.memref_slice %arg2[%30, %c0_i32_56] : memref<1000x128xf32, #tpu.memory_space<any>> -> memref<1x128xf32, #tpu.memory_space<any>>
    %c4_i32_57 = arith.constant 4 : i32
    %c0_i32_58 = arith.constant 0 : i32
    %73 = tpu.memref_slice %arg3[%c4_i32_57, %c0_i32_58] : memref<8x128xf32, #tpu.memory_space<vmem>> -> memref<1x128xf32, #tpu.memory_space<vmem>>
    %74 = tpu.memref_slice %arg4[%c4_i32_55] : memref<8x!tpu.dma_semaphore, #tpu.memory_space<semaphore_mem>> -> memref<1x!tpu.dma_semaphore, #tpu.memory_space<semaphore_mem>>
    %75 = tpu.memref_squeeze %74 : memref<1x!tpu.dma_semaphore, #tpu.memory_space<semaphore_mem>> -> memref<!tpu.dma_semaphore, #tpu.memory_space<semaphore_mem>>
    tpu.wait_dma2 semaphore(%75 : memref<!tpu.dma_semaphore, #tpu.memory_space<semaphore_mem>>) src(%72 : memref<1x128xf32, #tpu.memory_space<any>>) dst(%73 : memref<1x128xf32, #tpu.memory_space<vmem>>)
    %c5_i32_59 = arith.constant 5 : i32
    %c0_i32_60 = arith.constant 0 : i32
    %76 = tpu.memref_slice %arg2[%37, %c0_i32_60] : memref<1000x128xf32, #tpu.memory_space<any>> -> memref<1x128xf32, #tpu.memory_space<any>>
    %c5_i32_61 = arith.constant 5 : i32
    %c0_i32_62 = arith.constant 0 : i32
    %77 = tpu.memref_slice %arg3[%c5_i32_61, %c0_i32_62] : memref<8x128xf32, #tpu.memory_space<vmem>> -> memref<1x128xf32, #tpu.memory_space<vmem>>
    %78 = tpu.memref_slice %arg4[%c5_i32_59] : memref<8x!tpu.dma_semaphore, #tpu.memory_space<semaphore_mem>> -> memref<1x!tpu.dma_semaphore, #tpu.memory_space<semaphore_mem>>
    %79 = tpu.memref_squeeze %78 : memref<1x!tpu.dma_semaphore, #tpu.memory_space<semaphore_mem>> -> memref<!tpu.dma_semaphore, #tpu.memory_space<semaphore_mem>>
    tpu.wait_dma2 semaphore(%79 : memref<!tpu.dma_semaphore, #tpu.memory_space<semaphore_mem>>) src(%76 : memref<1x128xf32, #tpu.memory_space<any>>) dst(%77 : memref<1x128xf32, #tpu.memory_space<vmem>>)
    %c6_i32_63 = arith.constant 6 : i32
    %c0_i32_64 = arith.constant 0 : i32
    %80 = tpu.memref_slice %arg2[%44, %c0_i32_64] : memref<1000x128xf32, #tpu.memory_space<any>> -> memref<1x128xf32, #tpu.memory_space<any>>
    %c6_i32_65 = arith.constant 6 : i32
    %c0_i32_66 = arith.constant 0 : i32
    %81 = tpu.memref_slice %arg3[%c6_i32_65, %c0_i32_66] : memref<8x128xf32, #tpu.memory_space<vmem>> -> memref<1x128xf32, #tpu.memory_space<vmem>>
    %82 = tpu.memref_slice %arg4[%c6_i32_63] : memref<8x!tpu.dma_semaphore, #tpu.memory_space<semaphore_mem>> -> memref<1x!tpu.dma_semaphore, #tpu.memory_space<semaphore_mem>>
    %83 = tpu.memref_squeeze %82 : memref<1x!tpu.dma_semaphore, #tpu.memory_space<semaphore_mem>> -> memref<!tpu.dma_semaphore, #tpu.memory_space<semaphore_mem>>
    tpu.wait_dma2 semaphore(%83 : memref<!tpu.dma_semaphore, #tpu.memory_space<semaphore_mem>>) src(%80 : memref<1x128xf32, #tpu.memory_space<any>>) dst(%81 : memref<1x128xf32, #tpu.memory_space<vmem>>)
    %c7_i32_67 = arith.constant 7 : i32
    %c0_i32_68 = arith.constant 0 : i32
    %84 = tpu.memref_slice %arg2[%51, %c0_i32_68] : memref<1000x128xf32, #tpu.memory_space<any>> -> memref<1x128xf32, #tpu.memory_space<any>>
    %c7_i32_69 = arith.constant 7 : i32
    %c0_i32_70 = arith.constant 0 : i32
    %85 = tpu.memref_slice %arg3[%c7_i32_69, %c0_i32_70] : memref<8x128xf32, #tpu.memory_space<vmem>> -> memref<1x128xf32, #tpu.memory_space<vmem>>
    %86 = tpu.memref_slice %arg4[%c7_i32_67] : memref<8x!tpu.dma_semaphore, #tpu.memory_space<semaphore_mem>> -> memref<1x!tpu.dma_semaphore, #tpu.memory_space<semaphore_mem>>
    %87 = tpu.memref_squeeze %86 : memref<1x!tpu.dma_semaphore, #tpu.memory_space<semaphore_mem>> -> memref<!tpu.dma_semaphore, #tpu.memory_space<semaphore_mem>>
    tpu.wait_dma2 semaphore(%87 : memref<!tpu.dma_semaphore, #tpu.memory_space<semaphore_mem>>) src(%84 : memref<1x128xf32, #tpu.memory_space<any>>) dst(%85 : memref<1x128xf32, #tpu.memory_space<vmem>>)
    return
  }
  func.func @transform_1(%arg0: i32, %arg1: memref<8xi32, #tpu.memory_space<smem>>) -> (i32, i32) {
    %c0_i32 = arith.constant 0 : i32
    %c0_i32_0 = arith.constant 0 : i32
    %c0_i32_1 = arith.constant 0 : i32
    return %c0_i32, %c0_i32_0 : i32, i32
  }
}

</mosaic_0001>

<llo_original>
// kernel: tpu_custom_call.1
$region0: #{tpu_custom_call.1}
  #allocation0 [shape = 'u32[]', space=smem, size = 0x4, offset = 0x4, fixed_abs, tag = 'smem constant byte address 0x4 - core index']
  #allocation1 [shape = 'u32[144,128]{1,0:T(1,128)}', space=vmem, size = 0x12000, scoped, tag = 'internal scratch']
  #allocation2 [shape = 's32[8]{0}', space=sflag, size = 0x20, scoped, tag = 'scratch operand']
  #allocation3 [shape = 's32[1]{0}', space=sflag, size = 0x4, scoped, tag = 'scoped memory for tpu_custom_call.1']
  #allocation4 [shape = 'u8[512]{0}', space=smem, size = 0x200, scoped, tag = 'prefetched SMEM operand 0']
  #allocation7 [shape = 's32[]', space=sflag, size = 0x4, offset = 0, fixed_abs, tag = 'sflag constant byte address 0x0 - dummy sync flag']
  #allocation8 [shape = 's32[]', space=sflag, size = 0x4, offset = 0, fixed_abs, tag = 'sflag constant byte address 0x0 - dummy sync flag']
  #allocation9 [shape = 'u32[]', space=smem, size = 0x4, offset = 0x44, fixed_abs, tag = 'smem constant byte address 0x44 - assertion arg 0']
  #allocation10 [shape = 'u32[]', space=smem, size = 0x4, offset = 0x48, fixed_abs, tag = 'smem constant byte address 0x48 - assertion arg 1']
  #allocation11 [shape = 's32[]', space=sflag, size = 0x4, offset = 0, fixed_abs, tag = 'sflag constant byte address 0x0 - dummy sync flag']
  #allocation12 [shape = 's32[]', space=sflag, size = 0x4, offset = 0, fixed_abs, tag = 'sflag constant byte address 0x0 - dummy sync flag']
  #allocation13 [shape = 's32[]', space=sflag, size = 0x4, offset = 0, fixed_abs, tag = 'sflag constant byte address 0x0 - dummy sync flag']
  #allocation14 [shape = 's32[]', space=sflag, size = 0x4, offset = 0, fixed_abs, tag = 'sflag constant byte address 0x0 - dummy sync flag']
  #allocation15 [shape = 's32[]', space=sflag, size = 0x4, offset = 0, fixed_abs, tag = 'sflag constant byte address 0x0 - dummy sync flag']
  #allocation16 [shape = 's32[]', space=sflag, size = 0x4, offset = 0, fixed_abs, tag = 'sflag constant byte address 0x0 - dummy sync flag']
  #allocation17 [shape = 's32[]', space=sflag, size = 0x4, offset = 0, fixed_abs, tag = 'sflag constant byte address 0x0 - dummy sync flag']
  #allocation18 [shape = 's32[]', space=sflag, size = 0x4, offset = 0, fixed_abs, tag = 'sflag constant byte address 0x0 - dummy sync flag']
  #allocation19 [shape = 's32[]', space=sflag, size = 0x4, offset = 0, fixed_abs, tag = 'sflag constant byte address 0x0 - dummy sync flag']
  #allocation20 [shape = 's32[]', space=sflag, size = 0x4, offset = 0, fixed_abs, tag = 'sflag constant byte address 0x0 - dummy sync flag']
  #allocation21 [shape = 's32[]', space=sflag, size = 0x4, offset = 0, fixed_abs, tag = 'sflag constant byte address 0x0 - dummy sync flag']
  #allocation22 [shape = 's32[]', space=sflag, size = 0x4, offset = 0, fixed_abs, tag = 'sflag constant byte address 0x0 - dummy sync flag']
  #allocation23 [shape = 's32[]', space=sflag, size = 0x4, offset = 0, fixed_abs, tag = 'sflag constant byte address 0x0 - dummy sync flag']
  #allocation24 [shape = 's32[]', space=sflag, size = 0x4, offset = 0, fixed_abs, tag = 'sflag constant byte address 0x0 - dummy sync flag']
  %s0 = inlined_call_operand.hbm [shape: s32[8], index: 0, kind: input, shape index: {}]
  %s1 = inlined_call_operand.hbm [shape: f32[1000,128], index: 1, kind: input, shape index: {}]
  %s2 = inlined_call_operand.hbm [shape: f32[8,128], index: 2, kind: output, shape index: {}]
  %s3 = sld [smem:[#allocation0]]
  $region42: #{tpu_custom_call.1} parent=0
    _
  %s5 = ssub.s32 1, %s3
  %s6 = scalar_select 0, %s5, %s3
  %8 = dma.hbm_to_smem %s0, 16, [#allocation4], [#allocation3]
  %9 = dma.done [#allocation3], 16
  %10 = sfence
  $region1: #{tpu_custom_call.1} parent=0
    #allocation5 [shape = 'u8[4096]{0}', space=vmem, size = 0x1000, scoped, tag = 'output window, operand 0, single buffered']
    #allocation6 [shape = 's32[1]{0}', space=sflag, size = 0x4, scoped, tag = 'scoped memory for tpu_custom_call.1']
    %11 = vsyncpa [#allocation6], 0
    %s12 = sld [smem:[#allocation4]]
    %p13 = scmp.gt.s32.totalorder %s12, 0
    %s14 = scalar_select %p13, %s12, 0
    %p15 = scmp.lt.s32.totalorder %s14, 999
    %s16 = scalar_select %p15, %s14, 999
    %s17 = smul.addr %s16, 16
    %s18 = scalar_lea.hbm %s1, %s17
    // Predicated region
    $region2: #{tpu_custom_call.1} parent=1 // pred_check
      _
    $region3: #{tpu_custom_call.1} parent=1 // pred_check_branch
      %20 = sbr.rel target = $region5
    $region4: #{tpu_custom_call.1} parent=1 // pred_region
      %21 = sst [smem:[#allocation9]] [#allocation8]
      %22 = sst [smem:[#allocation10]] [#allocation7]
    $region5: #{tpu_custom_call.1} parent=1 // pred_fallthru
      _
    %24 = shalt.err (0)
    %s26 = sshll.u32 [#allocation5], 4
    %s27 = int_to_ptr.vmem [resolvable:$true] %s26
    %29 = dma.hbm_to_vmem [thread:$0]  %s18, 16, %s27, [#allocation2]
    %s30 = sld [smem:[#allocation4 + $0x1]]
    %p31 = scmp.gt.s32.totalorder %s30, 0
    %s32 = scalar_select %p31, %s30, 0
    %p33 = scmp.lt.s32.totalorder %s32, 999
    %s34 = scalar_select %p33, %s32, 999
    %s35 = smul.addr %s34, 16
    %s36 = scalar_lea.hbm %s1, %s35
    %s37 = scalar_lea.vmem [#allocation5], 1
    %s38 = scalar_lea.sflag [#allocation2], 1
    // Predicated region
    $region6: #{tpu_custom_call.1} parent=1 // pred_check
      _
    $region7: #{tpu_custom_call.1} parent=1 // pred_check_branch
      %40 = sbr.rel target = $region9
    $region8: #{tpu_custom_call.1} parent=1 // pred_region
      %41 = sst [smem:[#allocation9]] [#allocation12]
      %42 = sst [smem:[#allocation10]] [#allocation11]
    $region9: #{tpu_custom_call.1} parent=1 // pred_fallthru
      _
    %44 = shalt.err (0)
    %s46 = sshll.u32 %s37, 4
    %s47 = int_to_ptr.vmem [resolvable:$true] %s46
    %49 = dma.hbm_to_vmem [thread:$0]  %s36, 16, %s47, %s38
    %s50 = sld [smem:[#allocation4 + $0x2]]
    %p51 = scmp.gt.s32.totalorder %s50, 0
    %s52 = scalar_select %p51, %s50, 0
    %p53 = scmp.lt.s32.totalorder %s52, 999
    %s54 = scalar_select %p53, %s52, 999
    %s55 = smul.addr %s54, 16
    %s56 = scalar_lea.hbm %s1, %s55
    %s57 = scalar_lea.vmem [#allocation5], 2
    %s58 = scalar_lea.sflag [#allocation2], 2
    // Predicated region
    $region10: #{tpu_custom_call.1} parent=1 // pred_check
      _
    $region11: #{tpu_custom_call.1} parent=1 // pred_check_branch
      %60 = sbr.rel target = $region13
    $region12: #{tpu_custom_call.1} parent=1 // pred_region
      %61 = sst [smem:[#allocation9]] [#allocation14]
      %62 = sst [smem:[#allocation10]] [#allocation13]
    $region13: #{tpu_custom_call.1} parent=1 // pred_fallthru
      _
    %64 = shalt.err (0)
    %s66 = sshll.u32 %s57, 4
    %s67 = int_to_ptr.vmem [resolvable:$true] %s66
    %69 = dma.hbm_to_vmem [thread:$0]  %s56, 16, %s67, %s58
    %s70 = sld [smem:[#allocation4 + $0x3]]
    %p71 = scmp.gt.s32.totalorder %s70, 0
    %s72 = scalar_select %p71, %s70, 0
    %p73 = scmp.lt.s32.totalorder %s72, 999
    %s74 = scalar_select %p73, %s72, 999
    %s75 = smul.addr %s74, 16
    %s76 = scalar_lea.hbm %s1, %s75
    %s77 = scalar_lea.vmem [#allocation5], 3
    %s78 = scalar_lea.sflag [#allocation2], 3
    // Predicated region
    $region14: #{tpu_custom_call.1} parent=1 // pred_check
      _
    $region15: #{tpu_custom_call.1} parent=1 // pred_check_branch
      %80 = sbr.rel target = $region17
    $region16: #{tpu_custom_call.1} parent=1 // pred_region
      %81 = sst [smem:[#allocation9]] [#allocation16]
      %82 = sst [smem:[#allocation10]] [#allocation15]
    $region17: #{tpu_custom_call.1} parent=1 // pred_fallthru
      _
    %84 = shalt.err (0)
    %s86 = sshll.u32 %s77, 4
    %s87 = int_to_ptr.vmem [resolvable:$true] %s86
    %89 = dma.hbm_to_vmem [thread:$0]  %s76, 16, %s87, %s78
    %s90 = sld [smem:[#allocation4 + $0x4]]
    %p91 = scmp.gt.s32.totalorder %s90, 0
    %s92 = scalar_select %p91, %s90, 0
    %p93 = scmp.lt.s32.totalorder %s92, 999
    %s94 = scalar_select %p93, %s92, 999
    %s95 = smul.addr %s94, 16
    %s96 = scalar_lea.hbm %s1, %s95
    %s97 = scalar_lea.vmem [#allocation5], 4
    %s98 = scalar_lea.sflag [#allocation2], 4
    // Predicated region
    $region18: #{tpu_custom_call.1} parent=1 // pred_check
      _
    $region19: #{tpu_custom_call.1} parent=1 // pred_check_branch
      %100 = sbr.rel target = $region21
    $region20: #{tpu_custom_call.1} parent=1 // pred_region
      %101 = sst [smem:[#allocation9]] [#allocation18]
      %102 = sst [smem:[#allocation10]] [#allocation17]
    $region21: #{tpu_custom_call.1} parent=1 // pred_fallthru
      _
    %104 = shalt.err (0)
    %s106 = sshll.u32 %s97, 4
    %s107 = int_to_ptr.vmem [resolvable:$true] %s106
    %109 = dma.hbm_to_vmem [thread:$0]  %s96, 16, %s107, %s98
    %s110 = sld [smem:[#allocation4 + $0x5]]
    %p111 = scmp.gt.s32.totalorder %s110, 0
    %s112 = scalar_select %p111, %s110, 0
    %p113 = scmp.lt.s32.totalorder %s112, 999
    %s114 = scalar_select %p113, %s112, 999
    %s115 = smul.addr %s114, 16
    %s116 = scalar_lea.hbm %s1, %s115
    %s117 = scalar_lea.vmem [#allocation5], 5
    %s118 = scalar_lea.sflag [#allocation2], 5
    // Predicated region
    $region22: #{tpu_custom_call.1} parent=1 // pred_check
      _
    $region23: #{tpu_custom_call.1} parent=1 // pred_check_branch
      %120 = sbr.rel target = $region25
    $region24: #{tpu_custom_call.1} parent=1 // pred_region
      %121 = sst [smem:[#allocation9]] [#allocation20]
      %122 = sst [smem:[#allocation10]] [#allocation19]
    $region25: #{tpu_custom_call.1} parent=1 // pred_fallthru
      _
    %124 = shalt.err (0)
    %s126 = sshll.u32 %s117, 4
    %s127 = int_to_ptr.vmem [resolvable:$true] %s126
    %129 = dma.hbm_to_vmem [thread:$0]  %s116, 16, %s127, %s118
    %s130 = sld [smem:[#allocation4 + $0x6]]
    %p131 = scmp.gt.s32.totalorder %s130, 0
    %s132 = scalar_select %p131, %s130, 0
    %p133 = scmp.lt.s32.totalorder %s132, 999
    %s134 = scalar_select %p133, %s132, 999
    %s135 = smul.addr %s134, 16
    %s136 = scalar_lea.hbm %s1, %s135
    %s137 = scalar_lea.vmem [#allocation5], 6
    %s138 = scalar_lea.sflag [#allocation2], 6
    // Predicated region
    $region26: #{tpu_custom_call.1} parent=1 // pred_check
      _
    $region27: #{tpu_custom_call.1} parent=1 // pred_check_branch
      %140 = sbr.rel target = $region29
    $region28: #{tpu_custom_call.1} parent=1 // pred_region
      %141 = sst [smem:[#allocation9]] [#allocation22]
      %142 = sst [smem:[#allocation10]] [#allocation21]
    $region29: #{tpu_custom_call.1} parent=1 // pred_fallthru
      _
    %144 = shalt.err (0)
    %s146 = sshll.u32 %s137, 4
    %s147 = int_to_ptr.vmem [resolvable:$true] %s146
    %149 = dma.hbm_to_vmem [thread:$0]  %s136, 16, %s147, %s138
    %s150 = sld [smem:[#allocation4 + $0x7]]
    %p151 = scmp.gt.s32.totalorder %s150, 0
    %s152 = scalar_select %p151, %s150, 0
    %p153 = scmp.lt.s32.totalorder %s152, 999
    %s154 = scalar_select %p153, %s152, 999
    %s155 = smul.addr %s154, 16
    %s156 = scalar_lea.hbm %s1, %s155
    %s157 = scalar_lea.vmem [#allocation5], 7
    %s158 = scalar_lea.sflag [#allocation2], 7
    // Predicated region
    $region30: #{tpu_custom_call.1} parent=1 // pred_check
      _
    $region31: #{tpu_custom_call.1} parent=1 // pred_check_branch
      %160 = sbr.rel target = $region33
    $region32: #{tpu_custom_call.1} parent=1 // pred_region
      %161 = sst [smem:[#allocation9]] [#allocation24]
      %162 = sst [smem:[#allocation10]] [#allocation23]
    $region33: #{tpu_custom_call.1} parent=1 // pred_fallthru
      _
    %164 = shalt.err (0)
    %s166 = sshll.u32 %s157, 4
    %s167 = int_to_ptr.vmem [resolvable:$true] %s166
    %169 = dma.hbm_to_vmem [thread:$0]  %s156, 16, %s167, %s158
    %s170 = smul.u32 1, 1
    %s171 = sshll.u32 %s170, 4
    %172 = dma.done [#allocation2], %s171
    %s173 = sshll.u32 %s170, 4
    %174 = dma.done %s38, %s173
    %s175 = sshll.u32 %s170, 4
    %176 = dma.done %s58, %s175
    %s177 = sshll.u32 %s170, 4
    %178 = dma.done %s78, %s177
    %s179 = sshll.u32 %s170, 4
    %180 = dma.done %s98, %s179
    %s181 = sshll.u32 %s170, 4
    %182 = dma.done %s118, %s181
    %s183 = sshll.u32 %s170, 4
    %184 = dma.done %s138, %s183
    %s185 = sshll.u32 %s170, 4
    %186 = dma.done %s158, %s185
    // Predicated region
    $region34: #{tpu_custom_call.1} parent=1 // pred_check
      _
    $region35: #{tpu_custom_call.1} parent=1 // pred_check_branch
      %188 = sbr.rel (0) target = $region37
    $region36: #{tpu_custom_call.1} parent=1 // pred_region
      %s190 = ssub.s32 128, 128
      %191 = vsyncadd [#allocation6], %s190
      %s193 = sshll.u32 [#allocation5], 4
      %s194 = int_to_ptr.vmem [resolvable:$true] %s193
      %196 = dma.vmem_to_hbm [thread:$0]  %s194, 128, %s2, [#allocation6]
    $region37: #{tpu_custom_call.1} parent=1 // pred_fallthru
      _
    // Predicated region
    $region38: #{tpu_custom_call.1} parent=1 // pred_check
      _
    $region39: #{tpu_custom_call.1} parent=1 // pred_check_branch
      %198 = sbr.rel (0) target = $region41
    $region40: #{tpu_custom_call.1} parent=1 // pred_region
      %199 = dma.done [#allocation6], 128
    $region41: #{tpu_custom_call.1} parent=1 // pred_fallthru
      _
    %200 = vsyncpa [#allocation6], 1
  %201 = vsyncmov [#allocation2]
  %s202 = vpop.sfrf %201
  %p203 = scmp.eq.s32.totalorder %s202, 0
  %p204 = pneg %p203
  %206 = shalt.err (%p204)
  %s207 = scalar_lea.sflag [#allocation2], 1
  %208 = vsyncmov %s207
  %s209 = vpop.sfrf %208
  %p210 = scmp.eq.s32.totalorder %s209, 0
  %p211 = pneg %p210
  %213 = shalt.err (%p211)
  %s214 = scalar_lea.sflag [#allocation2], 2
  %215 = vsyncmov %s214
  %s216 = vpop.sfrf %215
  %p217 = scmp.eq.s32.totalorder %s216, 0
  %p218 = pneg %p217
  %220 = shalt.err (%p218)
  %s221 = scalar_lea.sflag [#allocation2], 3
  %222 = vsyncmov %s221
  %s223 = vpop.sfrf %222
  %p224 = scmp.eq.s32.totalorder %s223, 0
  %p225 = pneg %p224
  %227 = shalt.err (%p225)
  %s228 = scalar_lea.sflag [#allocation2], 4
  %229 = vsyncmov %s228
  %s230 = vpop.sfrf %229
  %p231 = scmp.eq.s32.totalorder %s230, 0
  %p232 = pneg %p231
  %234 = shalt.err (%p232)
  %s235 = scalar_lea.sflag [#allocation2], 5
  %236 = vsyncmov %s235
  %s237 = vpop.sfrf %236
  %p238 = scmp.eq.s32.totalorder %s237, 0
  %p239 = pneg %p238
  %241 = shalt.err (%p239)
  %s242 = scalar_lea.sflag [#allocation2], 6
  %243 = vsyncmov %s242
  %s244 = vpop.sfrf %243
  %p245 = scmp.eq.s32.totalorder %s244, 0
  %p246 = pneg %p245
  %248 = shalt.err (%p246)
  %s249 = scalar_lea.sflag [#allocation2], 7
  %250 = vsyncmov %s249
  %s251 = vpop.sfrf %250
  %p252 = scmp.eq.s32.totalorder %s251, 0
  %p253 = pneg %p252
  %255 = shalt.err (%p253)

</llo_original>
